<compile_context>
chip_gen: v7x
topology: tpu7x:2x2x1
jax: 0.10.0
libtpu: 0.0.40
codegen_flags: <defaults>
</compile_context>

<pallas_src>
import math

import jax
import jax.numpy as jnp
from jax.experimental import pallas as pl
from jax.experimental.pallas import tpu as pltpu


def _critic_kernel(x_ref, w1_ref, b1_ref, w2_ref, b2_ref,
                   w3_ref, b3_ref, w4_ref, b4_ref, out_ref):
    # x_ref:   (B, d_in)                shared across the ensemble
    # w1_ref:  (1, d_in, E_BLK*H)       layer-1 weights folded over the block
    # b1_ref:  (1, 1, E_BLK*H)
    # w2_ref:  (1, E_BLK, H, H)         b2_ref: (1, E_BLK, 1, H)
    # w3_ref:  (1, E_BLK, H, H)         b3_ref: (1, E_BLK, 1, H)
    # w4_ref:  (1, E_BLK, H)            head weights (trailing 1 dropped)
    # b4_ref:  (1, E_BLK, 1)
    # out_ref: (1, E_BLK, B)            lane-dense output block
    e_blk = w2_ref.shape[1]
    hidden = w2_ref.shape[-1]

    x = x_ref[...]                                               # (B, d_in)

    # Layer 1: one MXU matmul with N = E_BLK*H for all critics in the block.
    h1 = jnp.dot(x, w1_ref[0], preferred_element_type=jnp.float32) + b1_ref[0]
    h1 = jnp.maximum(h1, 0.0)                                    # (B, E_BLK*H)

    h3_rows = []
    for i in range(e_blk):                                       # static unroll
        h = h1[:, i * hidden:(i + 1) * hidden]                   # (B, H)
        h = jnp.dot(h, w2_ref[0, i],
                    preferred_element_type=jnp.float32) + b2_ref[0, i]
        h = jnp.maximum(h, 0.0)
        h = jnp.dot(h, w3_ref[0, i],
                    preferred_element_type=jnp.float32) + b3_ref[0, i]
        h = jnp.maximum(h, 0.0)
        h3_rows.append(h)
    h3 = jnp.stack(h3_rows, axis=0)                              # (E_BLK, B, H)

    # Head (out_features == 1): VPU multiply + lane reduce instead of an N=1
    # MXU matmul, feeding one full lane-dense (E_BLK, B) store.
    q = jnp.sum(h3 * w4_ref[0][:, None, :], axis=-1)             # (E_BLK, B)
    q = q + b4_ref[0]                                            # + (E_BLK, 1)
    out_ref[...] = q[None].astype(out_ref.dtype)


def _choose_e_block(num_critics, d_in, hidden,
                    vmem_budget_bytes=8 << 20, dtype_bytes=4):
    """How many critics to process per grid step.

    Prefer >=2 grid steps (so the "parallel" grid axis can be sharded across
    v7x's two TensorCores) with the biggest block that keeps the
    double-buffered weight slab under a conservative VMEM budget; for tiny
    ensembles fall back to a single step holding everything.
    """
    per_critic = dtype_bytes * (d_in * hidden + 2 * hidden * hidden
                                + 4 * hidden + 2)
    fitting = [d for d in range(num_critics, 0, -1)
               if num_critics % d == 0
               and 2 * d * per_critic <= vmem_budget_bytes]
    if not fitting:
        return 1
    for d in fitting:
        if 2 <= d < num_critics:      # >=2 grid steps, >=2 critics per step
            return d
    return fitting[0]                 # whole ensemble in one step (or 1)


def vectorized_critic_forward(state, action, params, e_block=None):
    """Pallas implementation of VectorizedCritic.forward.

    state : [B, state_dim], action : [B, action_dim]
    returns q_values : [num_critics, B]
    """
    (w1, b1), (w2, b2), (w3, b3), (w4, b4) = params
    E, d_in, H = w1.shape
    x = jnp.concatenate([state, action], axis=-1).astype(jnp.float32)
    B = x.shape[0]
    assert x.shape[1] == d_in

    if e_block is None:
        e_block = _choose_e_block(E, d_in, H)
    assert E % e_block == 0
    G = E // e_block

    # Re-pack parameters into per-block slabs.  (Cheap XLA reshapes; in a real
    # training loop the params would be stored in this layout once.)
    w1g = (w1.reshape(G, e_block, d_in, H)
              .transpose(0, 2, 1, 3)
              .reshape(G, d_in, e_block * H))
    b1g = b1.reshape(G, e_block, H).reshape(G, 1, e_block * H)
    w2g = w2.reshape(G, e_block, H, H)
    b2g = b2.reshape(G, e_block, 1, H)
    w3g = w3.reshape(G, e_block, H, H)
    b3g = b3.reshape(G, e_block, 1, H)
    w4g = w4.reshape(G, e_block, H)          # (E, H, 1) -> drop trailing 1
    b4g = b4.reshape(G, e_block, 1)

    out = pl.pallas_call(
        _critic_kernel,
        out_shape=jax.ShapeDtypeStruct((G, e_block, B), jnp.float32),
        grid_spec=pltpu.PrefetchScalarGridSpec(
            num_scalar_prefetch=0,
            grid=(G,),
            in_specs=[
                pl.BlockSpec((B, d_in), lambda g: (0, 0)),             # x
                pl.BlockSpec((1, d_in, e_block * H), lambda g: (g, 0, 0)),
                pl.BlockSpec((1, 1, e_block * H), lambda g: (g, 0, 0)),
                pl.BlockSpec((1, e_block, H, H), lambda g: (g, 0, 0, 0)),
                pl.BlockSpec((1, e_block, 1, H), lambda g: (g, 0, 0, 0)),
                pl.BlockSpec((1, e_block, H, H), lambda g: (g, 0, 0, 0)),
                pl.BlockSpec((1, e_block, 1, H), lambda g: (g, 0, 0, 0)),
                pl.BlockSpec((1, e_block, H), lambda g: (g, 0, 0)),
                pl.BlockSpec((1, e_block, 1), lambda g: (g, 0, 0)),
            ],
            out_specs=pl.BlockSpec((1, e_block, B), lambda g: (g, 0, 0)),
        ),
        compiler_params=pltpu.CompilerParams(
            dimension_semantics=("parallel",)),
    )(x, w1g, b1g, w2g, b2g, w3g, b3g, w4g, b4g)

    return out.reshape(E, B)                                      # [E, B]


def init_params(key, state_dim, action_dim, hidden_dim, num_critics):
    """Deterministic init mirroring VectorizedCritic.__init__ semantics."""
    d_in = state_dim + action_dim
    ks = jax.random.split(key, 8)

    def kaiming_uniform_w(k, fan_in, shape):
        # kaiming_uniform_ with a=sqrt(5) -> bound = 1/sqrt(fan_in)
        bound = 1.0 / math.sqrt(fan_in)
        return jax.random.uniform(k, shape, jnp.float32, -bound, bound)

    # layers 1..3: kaiming-uniform weights, bias constant 0.1 (per module init)
    w1 = kaiming_uniform_w(ks[0], d_in, (num_critics, d_in, hidden_dim))
    b1 = jnp.full((num_critics, 1, hidden_dim), 0.1, jnp.float32)
    w2 = kaiming_uniform_w(ks[1], hidden_dim,
                           (num_critics, hidden_dim, hidden_dim))
    b2 = jnp.full((num_critics, 1, hidden_dim), 0.1, jnp.float32)
    w3 = kaiming_uniform_w(ks[2], hidden_dim,
                           (num_critics, hidden_dim, hidden_dim))
    b3 = jnp.full((num_critics, 1, hidden_dim), 0.1, jnp.float32)
    # final layer: U(-0.003, 0.003) for both weight and bias
    w4 = jax.random.uniform(ks[3], (num_critics, hidden_dim, 1), jnp.float32,
                            -3e-3, 3e-3)
    b4 = jax.random.uniform(ks[4], (num_critics, 1, 1), jnp.float32,
                            -3e-3, 3e-3)
    return ((w1, b1), (w2, b2), (w3, b3), (w4, b4))


def reference_forward(state, action, params):
    """Pure-JAX reference for correctness check."""
    (w1, b1), (w2, b2), (w3, b3), (w4, b4) = params
    x = jnp.concatenate([state, action], axis=-1)
    x = jnp.broadcast_to(x[None], (w1.shape[0],) + x.shape)
    h = jnp.maximum(x @ w1 + b1, 0.0)
    h = jnp.maximum(h @ w2 + b2, 0.0)
    h = jnp.maximum(h @ w3 + b3, 0.0)
    q = h @ w4 + b4
    return q[..., 0]


if __name__ == "__main__":
    state_dim, action_dim, hidden_dim, num_critics = 11, 5, 32, 4
    batch = 8

    key = jax.random.PRNGKey(0)
    k_state, k_action, k_params = jax.random.split(key, 3)

    state = jax.random.normal(k_state, (batch, state_dim), jnp.float32)
    action = jax.random.normal(k_action, (batch, action_dim), jnp.float32)
    params = init_params(k_params, state_dim, action_dim, hidden_dim,
                         num_critics)

    q = vectorized_critic_forward(state, action, params)
    q = jax.block_until_ready(q)

    q_ref = reference_forward(state, action, params)
    assert q.shape == (num_critics, batch)
    assert jnp.allclose(q, q_ref, atol=1e-4, rtol=1e-4)

    print("KERNEL_OK")
</pallas_src>

<mosaic_0001>
module attributes {stable_mosaic.version = 11 : i64} {
  func.func @_critic_kernel(%arg0: i32, %arg1: memref<8x16xf32, #tpu.memory_space<vmem>>, %arg2: memref<1x16x64xf32, #tpu.memory_space<vmem>>, %arg3: memref<1x1x64xf32, #tpu.memory_space<vmem>>, %arg4: memref<1x2x32x32xf32, #tpu.memory_space<vmem>>, %arg5: memref<1x2x1x32xf32, #tpu.memory_space<vmem>>, %arg6: memref<1x2x32x32xf32, #tpu.memory_space<vmem>>, %arg7: memref<1x2x1x32xf32, #tpu.memory_space<vmem>>, %arg8: memref<1x2x32xf32, #tpu.memory_space<vmem>>, %arg9: memref<1x2x1xf32, #tpu.memory_space<vmem>>, %arg10: memref<1x2x8xf32, #tpu.memory_space<vmem>>) attributes {dimension_semantics = [#tpu.dimension_semantics<parallel>], iteration_bounds = array<i64: 2>, scalar_prefetch = 0 : i64, scratch_operands = 0 : i64, tpu.core_type = #tpu.core_type<tc>, window_params = [{pipeline_mode = #tpu.pipeline_mode<synchronous>, transform_indices = @transform_0, window_bounds = array<i64: 8, 16>}, {transform_indices = @transform_1, window_bounds = array<i64: 1, 16, 64>}, {transform_indices = @transform_2, window_bounds = array<i64: 1, 1, 64>}, {transform_indices = @transform_3, window_bounds = array<i64: 1, 2, 32, 32>}, {transform_indices = @transform_4, window_bounds = array<i64: 1, 2, 1, 32>}, {transform_indices = @transform_5, window_bounds = array<i64: 1, 2, 32, 32>}, {transform_indices = @transform_6, window_bounds = array<i64: 1, 2, 1, 32>}, {transform_indices = @transform_7, window_bounds = array<i64: 1, 2, 32>}, {transform_indices = @transform_8, window_bounds = array<i64: 1, 2, 1>}, {transform_indices = @transform_9, window_bounds = array<i64: 1, 2, 8>}]} {
    %c0 = arith.constant 0 : index
    %c0_0 = arith.constant 0 : index
    %0 = vector.load %arg1[%c0, %c0_0] : memref<8x16xf32, #tpu.memory_space<vmem>>, vector<8x16xf32>
    %c0_1 = arith.constant 0 : index
    %c0_2 = arith.constant 0 : index
    %c0_3 = arith.constant 0 : index
    %1 = vector.load %arg2[%c0_1, %c0_2, %c0_3] : memref<1x16x64xf32, #tpu.memory_space<vmem>>, vector<1x16x64xf32>
    %2 = vector.shape_cast %1 : vector<1x16x64xf32> to vector<16x64xf32>
    %cst = arith.constant dense<0.000000e+00> : vector<8x64xf32>
    %3 = tpu.matmul %0, %2, %cst {dimension_numbers = #tpu.dot_dimension_numbers<[1], [0], [0], [1], [0, 0, 1, 1], [], []>} : vector<8x16xf32>, vector<16x64xf32>, vector<8x64xf32> -> vector<8x64xf32>
    %c0_4 = arith.constant 0 : index
    %c0_5 = arith.constant 0 : index
    %c0_6 = arith.constant 0 : index
    %4 = vector.load %arg3[%c0_4, %c0_5, %c0_6] : memref<1x1x64xf32, #tpu.memory_space<vmem>>, vector<1x1x64xf32>
    %5 = vector.shape_cast %4 : vector<1x1x64xf32> to vector<1x64xf32>
    %6 = vector.broadcast %5 : vector<1x64xf32> to vector<8x64xf32>
    %7 = arith.addf %3, %6 : vector<8x64xf32>
    %cst_7 = arith.constant 0.000000e+00 : f32
    %8 = vector.broadcast %cst_7 : f32 to vector<8x64xf32>
    %9 = arith.maximumf %7, %8 : vector<8x64xf32>
    %10 = vector.extract_strided_slice %9 {offsets = [0, 0], sizes = [8, 32], strides = [1, 1]} : vector<8x64xf32> to vector<8x32xf32>
    %c0_8 = arith.constant 0 : index
    %c0_9 = arith.constant 0 : index
    %c0_10 = arith.constant 0 : index
    %c0_11 = arith.constant 0 : index
    %11 = vector.load %arg4[%c0_8, %c0_9, %c0_10, %c0_11] : memref<1x2x32x32xf32, #tpu.memory_space<vmem>>, vector<1x1x32x32xf32>
    %12 = vector.shape_cast %11 : vector<1x1x32x32xf32> to vector<32x32xf32>
    %cst_12 = arith.constant dense<0.000000e+00> : vector<8x32xf32>
    %13 = tpu.matmul %10, %12, %cst_12 {dimension_numbers = #tpu.dot_dimension_numbers<[1], [0], [0], [1], [0, 0, 1, 1], [], []>} : vector<8x32xf32>, vector<32x32xf32>, vector<8x32xf32> -> vector<8x32xf32>
    %c0_13 = arith.constant 0 : index
    %c0_14 = arith.constant 0 : index
    %c0_15 = arith.constant 0 : index
    %c0_16 = arith.constant 0 : index
    %14 = vector.load %arg5[%c0_13, %c0_14, %c0_15, %c0_16] : memref<1x2x1x32xf32, #tpu.memory_space<vmem>>, vector<1x1x1x32xf32>
    %15 = vector.shape_cast %14 : vector<1x1x1x32xf32> to vector<1x32xf32>
    %16 = vector.broadcast %15 : vector<1x32xf32> to vector<8x32xf32>
    %17 = arith.addf %13, %16 : vector<8x32xf32>
    %cst_17 = arith.constant 0.000000e+00 : f32
    %18 = vector.broadcast %cst_17 : f32 to vector<8x32xf32>
    %19 = arith.maximumf %17, %18 : vector<8x32xf32>
    %c0_18 = arith.constant 0 : index
    %c0_19 = arith.constant 0 : index
    %c0_20 = arith.constant 0 : index
    %c0_21 = arith.constant 0 : index
    %20 = vector.load %arg6[%c0_18, %c0_19, %c0_20, %c0_21] : memref<1x2x32x32xf32, #tpu.memory_space<vmem>>, vector<1x1x32x32xf32>
    %21 = vector.shape_cast %20 : vector<1x1x32x32xf32> to vector<32x32xf32>
    %cst_22 = arith.constant dense<0.000000e+00> : vector<8x32xf32>
    %22 = tpu.matmul %19, %21, %cst_22 {dimension_numbers = #tpu.dot_dimension_numbers<[1], [0], [0], [1], [0, 0, 1, 1], [], []>} : vector<8x32xf32>, vector<32x32xf32>, vector<8x32xf32> -> vector<8x32xf32>
    %c0_23 = arith.constant 0 : index
    %c0_24 = arith.constant 0 : index
    %c0_25 = arith.constant 0 : index
    %c0_26 = arith.constant 0 : index
    %23 = vector.load %arg7[%c0_23, %c0_24, %c0_25, %c0_26] : memref<1x2x1x32xf32, #tpu.memory_space<vmem>>, vector<1x1x1x32xf32>
    %24 = vector.shape_cast %23 : vector<1x1x1x32xf32> to vector<1x32xf32>
    %25 = vector.broadcast %24 : vector<1x32xf32> to vector<8x32xf32>
    %26 = arith.addf %22, %25 : vector<8x32xf32>
    %cst_27 = arith.constant 0.000000e+00 : f32
    %27 = vector.broadcast %cst_27 : f32 to vector<8x32xf32>
    %28 = arith.maximumf %26, %27 : vector<8x32xf32>
    %29 = vector.extract_strided_slice %9 {offsets = [0, 32], sizes = [8, 32], strides = [1, 1]} : vector<8x64xf32> to vector<8x32xf32>
    %c0_28 = arith.constant 0 : index
    %c1 = arith.constant 1 : index
    %c0_29 = arith.constant 0 : index
    %c0_30 = arith.constant 0 : index
    %30 = vector.load %arg4[%c0_28, %c1, %c0_29, %c0_30] : memref<1x2x32x32xf32, #tpu.memory_space<vmem>>, vector<1x1x32x32xf32>
    %31 = vector.shape_cast %30 : vector<1x1x32x32xf32> to vector<32x32xf32>
    %cst_31 = arith.constant dense<0.000000e+00> : vector<8x32xf32>
    %32 = tpu.matmul %29, %31, %cst_31 {dimension_numbers = #tpu.dot_dimension_numbers<[1], [0], [0], [1], [0, 0, 1, 1], [], []>} : vector<8x32xf32>, vector<32x32xf32>, vector<8x32xf32> -> vector<8x32xf32>
    %c0_32 = arith.constant 0 : index
    %c1_33 = arith.constant 1 : index
    %c0_34 = arith.constant 0 : index
    %c0_35 = arith.constant 0 : index
    %33 = vector.load %arg5[%c0_32, %c1_33, %c0_34, %c0_35] : memref<1x2x1x32xf32, #tpu.memory_space<vmem>>, vector<1x1x1x32xf32>
    %34 = vector.shape_cast %33 : vector<1x1x1x32xf32> to vector<1x32xf32>
    %35 = vector.broadcast %34 : vector<1x32xf32> to vector<8x32xf32>
    %36 = arith.addf %32, %35 : vector<8x32xf32>
    %cst_36 = arith.constant 0.000000e+00 : f32
    %37 = vector.broadcast %cst_36 : f32 to vector<8x32xf32>
    %38 = arith.maximumf %36, %37 : vector<8x32xf32>
    %c0_37 = arith.constant 0 : index
    %c1_38 = arith.constant 1 : index
    %c0_39 = arith.constant 0 : index
    %c0_40 = arith.constant 0 : index
    %39 = vector.load %arg6[%c0_37, %c1_38, %c0_39, %c0_40] : memref<1x2x32x32xf32, #tpu.memory_space<vmem>>, vector<1x1x32x32xf32>
    %40 = vector.shape_cast %39 : vector<1x1x32x32xf32> to vector<32x32xf32>
    %cst_41 = arith.constant dense<0.000000e+00> : vector<8x32xf32>
    %41 = tpu.matmul %38, %40, %cst_41 {dimension_numbers = #tpu.dot_dimension_numbers<[1], [0], [0], [1], [0, 0, 1, 1], [], []>} : vector<8x32xf32>, vector<32x32xf32>, vector<8x32xf32> -> vector<8x32xf32>
    %c0_42 = arith.constant 0 : index
    %c1_43 = arith.constant 1 : index
    %c0_44 = arith.constant 0 : index
    %c0_45 = arith.constant 0 : index
    %42 = vector.load %arg7[%c0_42, %c1_43, %c0_44, %c0_45] : memref<1x2x1x32xf32, #tpu.memory_space<vmem>>, vector<1x1x1x32xf32>
    %43 = vector.shape_cast %42 : vector<1x1x1x32xf32> to vector<1x32xf32>
    %44 = vector.broadcast %43 : vector<1x32xf32> to vector<8x32xf32>
    %45 = arith.addf %41, %44 : vector<8x32xf32>
    %cst_46 = arith.constant 0.000000e+00 : f32
    %46 = vector.broadcast %cst_46 : f32 to vector<8x32xf32>
    %47 = arith.maximumf %45, %46 : vector<8x32xf32>
    %48 = vector.shape_cast %28 : vector<8x32xf32> to vector<1x8x32xf32>
    %49 = vector.shape_cast %47 : vector<8x32xf32> to vector<1x8x32xf32>
    %50 = tpu.concatenate %48, %49 in 0 : vector<1x8x32xf32>, vector<1x8x32xf32> -> vector<2x8x32xf32>
    %c0_47 = arith.constant 0 : index
    %c0_48 = arith.constant 0 : index
    %c0_49 = arith.constant 0 : index
    %51 = vector.load %arg8[%c0_47, %c0_48, %c0_49] : memref<1x2x32xf32, #tpu.memory_space<vmem>>, vector<1x2x32xf32>
    %52 = vector.shape_cast %51 : vector<1x2x32xf32> to vector<2x32xf32>
    %53 = vector.shape_cast %52 : vector<2x32xf32> to vector<2x1x32xf32>
    %54 = vector.broadcast %53 : vector<2x1x32xf32> to vector<2x8x32xf32>
    %55 = arith.mulf %50, %54 : vector<2x8x32xf32>
    %cst_50 = arith.constant dense<0.000000e+00> : vector<2x8xf32>
    %56 = vector.multi_reduction <add>, %55, %cst_50 [2] : vector<2x8x32xf32> to vector<2x8xf32>
    %c0_51 = arith.constant 0 : index
    %c0_52 = arith.constant 0 : index
    %c0_53 = arith.constant 0 : index
    %57 = vector.load %arg9[%c0_51, %c0_52, %c0_53] : memref<1x2x1xf32, #tpu.memory_space<vmem>>, vector<1x2x1xf32>
    %58 = vector.shape_cast %57 : vector<1x2x1xf32> to vector<2x1xf32>
    %59 = vector.broadcast %58 : vector<2x1xf32> to vector<2x8xf32>
    %60 = arith.addf %56, %59 : vector<2x8xf32>
    %61 = vector.shape_cast %60 : vector<2x8xf32> to vector<1x2x8xf32>
    %c0_54 = arith.constant 0 : index
    %c0_55 = arith.constant 0 : index
    %c0_56 = arith.constant 0 : index
    %62 = vector.load %arg10[%c0_54, %c0_55, %c0_56] : memref<1x2x8xf32, #tpu.memory_space<vmem>>, vector<1x2x8xf32>
    tpu.vector_store %arg10[%c0_54, %c0_55, %c0_56], %61 {strides = array<i32>} : memref<1x2x8xf32, #tpu.memory_space<vmem>>, vector<1x2x8xf32>,
    return
  }
  func.func @transform_0(%arg0: i32) -> (i32, i32) {
    %c0_i32 = arith.constant 0 : i32
    %c0_i32_0 = arith.constant 0 : i32
    %c0_i32_1 = arith.constant 0 : i32
    return %c0_i32, %c0_i32_0 : i32, i32
  }
  func.func @transform_1(%arg0: i32) -> (i32, i32, i32) {
    %c0_i32 = arith.constant 0 : i32
    %c0_i32_0 = arith.constant 0 : i32
    %c0_i32_1 = arith.constant 0 : i32
    return %arg0, %c0_i32, %c0_i32_0 : i32, i32, i32
  }
  func.func @transform_2(%arg0: i32) -> (i32, i32, i32) {
    %c0_i32 = arith.constant 0 : i32
    %c0_i32_0 = arith.constant 0 : i32
    %c0_i32_1 = arith.constant 0 : i32
    return %arg0, %c0_i32, %c0_i32_0 : i32, i32, i32
  }
  func.func @transform_3(%arg0: i32) -> (i32, i32, i32, i32) {
    %c0_i32 = arith.constant 0 : i32
    %c0_i32_0 = arith.constant 0 : i32
    %c0_i32_1 = arith.constant 0 : i32
    %c0_i32_2 = arith.constant 0 : i32
    return %arg0, %c0_i32, %c0_i32_0, %c0_i32_1 : i32, i32, i32, i32
  }
  func.func @transform_4(%arg0: i32) -> (i32, i32, i32, i32) {
    %c0_i32 = arith.constant 0 : i32
    %c0_i32_0 = arith.constant 0 : i32
    %c0_i32_1 = arith.constant 0 : i32
    %c0_i32_2 = arith.constant 0 : i32
    return %arg0, %c0_i32, %c0_i32_0, %c0_i32_1 : i32, i32, i32, i32
  }
  func.func @transform_5(%arg0: i32) -> (i32, i32, i32, i32) {
    %c0_i32 = arith.constant 0 : i32
    %c0_i32_0 = arith.constant 0 : i32
    %c0_i32_1 = arith.constant 0 : i32
    %c0_i32_2 = arith.constant 0 : i32
    return %arg0, %c0_i32, %c0_i32_0, %c0_i32_1 : i32, i32, i32, i32
  }
  func.func @transform_6(%arg0: i32) -> (i32, i32, i32, i32) {
    %c0_i32 = arith.constant 0 : i32
    %c0_i32_0 = arith.constant 0 : i32
    %c0_i32_1 = arith.constant 0 : i32
    %c0_i32_2 = arith.constant 0 : i32
    return %arg0, %c0_i32, %c0_i32_0, %c0_i32_1 : i32, i32, i32, i32
  }
  func.func @transform_7(%arg0: i32) -> (i32, i32, i32) {
    %c0_i32 = arith.constant 0 : i32
    %c0_i32_0 = arith.constant 0 : i32
    %c0_i32_1 = arith.constant 0 : i32
    return %arg0, %c0_i32, %c0_i32_0 : i32, i32, i32
  }
  func.func @transform_8(%arg0: i32) -> (i32, i32, i32) {
    %c0_i32 = arith.constant 0 : i32
    %c0_i32_0 = arith.constant 0 : i32
    %c0_i32_1 = arith.constant 0 : i32
    return %arg0, %c0_i32, %c0_i32_0 : i32, i32, i32
  }
  func.func @transform_9(%arg0: i32) -> (i32, i32, i32) {
    %c0_i32 = arith.constant 0 : i32
    %c0_i32_0 = arith.constant 0 : i32
    %c0_i32_1 = arith.constant 0 : i32
    return %arg0, %c0_i32, %c0_i32_0 : i32, i32, i32
  }
}

</mosaic_0001>

<llo_original>
// kernel: tpu_custom_call.1
$region0: #{tpu_custom_call.1}
  #allocation0 [shape = 'u32[]', space=smem, size = 0x4, offset = 0x4, fixed_abs, tag = 'smem constant byte address 0x4 - core index']
  #allocation1 [shape = 'u32[144,128]{1,0:T(1,128)}', space=vmem, size = 0x12000, scoped, tag = 'internal scratch']
  %s0 = inlined_call_operand.hbm [shape: f32[8,16], index: 0, kind: input, shape index: {}]
  %s1 = inlined_call_operand.hbm [shape: f32[2,16,64], index: 1, kind: input, shape index: {}]
  %s2 = inlined_call_operand.hbm [shape: f32[2,1,64], index: 2, kind: input, shape index: {}]
  %s3 = inlined_call_operand.hbm [shape: f32[2,2,32,32], index: 3, kind: input, shape index: {}]
  %s4 = inlined_call_operand.vmem [shape: f32[2,2,1,32], index: 4, kind: input, shape index: {}]
  %s5 = inlined_call_operand.hbm [shape: f32[2,2,32,32], index: 5, kind: input, shape index: {}]
  %s6 = inlined_call_operand.vmem [shape: f32[2,2,1,32], index: 6, kind: input, shape index: {}]
  %s7 = inlined_call_operand.vmem [shape: f32[2,2,32], index: 7, kind: input, shape index: {}]
  %s8 = inlined_call_operand.vmem [shape: f32[2,2,1], index: 8, kind: input, shape index: {}]
  %s9 = inlined_call_operand.hbm [shape: f32[2,2,8], index: 9, kind: output, shape index: {}]
  %s10 = sld [smem:[#allocation0]]
  $region89: #{tpu_custom_call.1} parent=0
    _
  %s12 = ssub.s32 1, %s10
  %s13 = scalar_select 0, %s12, %s10
  $region1: #{tpu_custom_call.1} parent=0
    #allocation2 [shape = 'u8[4096]{0}', space=vmem, size = 0x1000, scoped, tag = 'input window, operand 0, single buffered']
    #allocation3 [shape = 's32[2]{0}', space=sflag, size = 0x8, scoped, tag = 'scoped memory for tpu_custom_call.1']
    #allocation4 [shape = 's32[2]{0}', space=sflag, size = 0x8, scoped, tag = 'scoped memory for tpu_custom_call.1']
    #allocation5 [shape = 'u8[16384]{0}', space=vmem, size = 0x4000, scoped, tag = 'input window, operand 1']
    #allocation6 [shape = 's32[2]{0}', space=sflag, size = 0x8, scoped, tag = 'scoped memory for tpu_custom_call.1']
    #allocation7 [shape = 'u8[1024]{0}', space=vmem, size = 0x400, scoped, tag = 'input window, operand 2']
    #allocation8 [shape = 'u8[65536]{0}', space=vmem, size = 0x10000, scoped, tag = 'input window, operand 3']
    #allocation9 [shape = 's32[2]{0}', space=sflag, size = 0x8, scoped, tag = 'scoped memory for tpu_custom_call.1']
    #allocation10 [shape = 'u8[65536]{0}', space=vmem, size = 0x10000, scoped, tag = 'input window, operand 5']
    #allocation11 [shape = 'u8[2048]{0}', space=vmem, size = 0x800, scoped, tag = 'output window, operand 0']
    %14 = vsyncpa [#allocation3], 0
    %15 = vsyncpa [#allocation6], 0
    %s16 = scalar_lea.sflag [#allocation6], 1
    %17 = vsyncpa %s16, 0
    %18 = vsyncpa [#allocation9], 0
    %s19 = scalar_lea.sflag [#allocation9], 1
    %20 = vsyncpa %s19, 0
    %21 = vsyncpa [#allocation4], 0
    %s22 = scalar_lea.sflag [#allocation4], 1
    %23 = vsyncpa %s22, 0
    loop: start=0, step=1, limit=4
    $region2: #{tpu_custom_call.1} parent=1 // loop_pre_header
      _
    $region3: #{tpu_custom_call.1} parent=1 // loop_header
      %s25 = sphi 0, %s29
      %p26 = scmp.ge.s32.totalorder %s25, 4
      %s33 = sphi 0, %s33
      %s35 = sphi 0, %s33
      %s36 = sphi 0, %s35
      %s50 = sphi 0, %s36
      %s56 = sphi 0, %s58
      %s59 = sphi 0, %s56
      %s60 = sphi 0, %s59
      %s76 = sphi 0, %s60
      %s82 = sphi 0, %s84
      %s85 = sphi 0, %s82
      %s86 = sphi 0, %s85
      %s102 = sphi 0, %s86
      %s108 = sphi 0, %s110
      %s111 = sphi 0, %s108
      %s112 = sphi 0, %s111
      %s128 = sphi 0, %s112
      %s134 = sphi 0, %s136
      %s137 = sphi 0, %s134
      %s138 = sphi 0, %s137
      %s154 = sphi 0, %s138
      %s160 = sphi 0, %s162
      %s163 = sphi 0, %s160
      %s164 = sphi 0, %s163
      %s180 = sphi 0, %s164
      %s186 = sphi 0, %s188
      %s189 = sphi 0, %s186
      %s190 = sphi 0, %s189
      %s206 = sphi 0, %s190
      %s212 = sphi 0, %s214
      %s215 = sphi 0, %s212
      %s216 = sphi 0, %s215
      %s232 = sphi 0, %s216
      %s238 = sphi 0, %s240
      %s241 = sphi 0, %s238
      %s242 = sphi 0, %s241
      %s258 = sphi 0, %s242
      %s264 = sphi 0, %s266
      %s267 = sphi 0, %s264
      %s268 = sphi 0, %s267
      %s284 = sphi 0, %s268
    $region4: #{tpu_custom_call.1} parent=1 // loop_header_branch
      %28 = sbr.rel (%p26) target = $region8
    $region5: #{tpu_custom_call.1} parent=1 // loop_body
      %s30 = ssub.s32 %s25, 1
      %s31 = ssub.s32 %s25, 2
      %s32 = sadd.s32 %s25, 1
      %s34 = sadd.s32 %s33, 1
      %p37 = scmp.eq.s32.totalorder %s25, 1
      %p38 = scmp.ne.s32.totalorder %s33, %s35
      %p39 = scmp.eq.s32.totalorder %s25, 0
      %p40 = por %p38, %p39
      %p41 = scmp.ne.s32.totalorder %s33, %s35
      %p42 = scmp.eq.s32.totalorder %s30, 1
      %p43 = por %p41, %p42
      %p44 = scmp.ne.s32.totalorder %s35, %s36
      %p45 = scmp.eq.s32.totalorder %s30, 0
      %p46 = por %p44, %p45
      %p47 = scmp.ne.s32.totalorder %s35, %s36
      %p48 = scmp.eq.s32.totalorder %s31, 1
      %p49 = por %p47, %p48
      %p51 = scmp.ne.s32.totalorder %s36, %s50
      %p52 = scmp.eq.s32.totalorder %s31, 0
      %p53 = por %p51, %p52
      %s54 = ssub.s32 %s25, %s32
      %p55 = scmp.eq.s32.totalorder %s54, 0
      %s57 = sadd.s32 %s56, 1
      %s58 = scalar_select %p55, %s56, %s57
      %p61 = pneg %p55
      %p62 = scmp.eq.s32.totalorder %s25, 1
      %p63 = por %p61, %p62
      %p64 = scmp.ne.s32.totalorder %s56, %s59
      %p65 = scmp.eq.s32.totalorder %s25, 0
      %p66 = por %p64, %p65
      %p67 = scmp.ne.s32.totalorder %s56, %s59
      %p68 = scmp.eq.s32.totalorder %s30, 1
      %p69 = por %p67, %p68
      %p70 = scmp.ne.s32.totalorder %s59, %s60
      %p71 = scmp.eq.s32.totalorder %s30, 0
      %p72 = por %p70, %p71
      %p73 = scmp.ne.s32.totalorder %s59, %s60
      %p74 = scmp.eq.s32.totalorder %s31, 1
      %p75 = por %p73, %p74
      %p77 = scmp.ne.s32.totalorder %s60, %s76
      %p78 = scmp.eq.s32.totalorder %s31, 0
      %p79 = por %p77, %p78
      %s80 = ssub.s32 %s25, %s32
      %p81 = scmp.eq.s32.totalorder %s80, 0
      %s83 = sadd.s32 %s82, 1
      %s84 = scalar_select %p81, %s82, %s83
      %p87 = pneg %p81
      %p88 = scmp.eq.s32.totalorder %s25, 1
      %p89 = por %p87, %p88
      %p90 = scmp.ne.s32.totalorder %s82, %s85
      %p91 = scmp.eq.s32.totalorder %s25, 0
      %p92 = por %p90, %p91
      %p93 = scmp.ne.s32.totalorder %s82, %s85
      %p94 = scmp.eq.s32.totalorder %s30, 1
      %p95 = por %p93, %p94
      %p96 = scmp.ne.s32.totalorder %s85, %s86
      %p97 = scmp.eq.s32.totalorder %s30, 0
      %p98 = por %p96, %p97
      %p99 = scmp.ne.s32.totalorder %s85, %s86
      %p100 = scmp.eq.s32.totalorder %s31, 1
      %p101 = por %p99, %p100
      %p103 = scmp.ne.s32.totalorder %s86, %s102
      %p104 = scmp.eq.s32.totalorder %s31, 0
      %p105 = por %p103, %p104
      %s106 = ssub.s32 %s25, %s32
      %p107 = scmp.eq.s32.totalorder %s106, 0
      %s109 = sadd.s32 %s108, 1
      %s110 = scalar_select %p107, %s108, %s109
      %p113 = pneg %p107
      %p114 = scmp.eq.s32.totalorder %s25, 1
      %p115 = por %p113, %p114
      %p116 = scmp.ne.s32.totalorder %s108, %s111
      %p117 = scmp.eq.s32.totalorder %s25, 0
      %p118 = por %p116, %p117
      %p119 = scmp.ne.s32.totalorder %s108, %s111
      %p120 = scmp.eq.s32.totalorder %s30, 1
      %p121 = por %p119, %p120
      %p122 = scmp.ne.s32.totalorder %s111, %s112
      %p123 = scmp.eq.s32.totalorder %s30, 0
      %p124 = por %p122, %p123
      %p125 = scmp.ne.s32.totalorder %s111, %s112
      %p126 = scmp.eq.s32.totalorder %s31, 1
      %p127 = por %p125, %p126
      %p129 = scmp.ne.s32.totalorder %s112, %s128
      %p130 = scmp.eq.s32.totalorder %s31, 0
      %p131 = por %p129, %p130
      %s132 = ssub.s32 %s25, %s32
      %p133 = scmp.eq.s32.totalorder %s132, 0
      %s135 = sadd.s32 %s134, 1
      %s136 = scalar_select %p133, %s134, %s135
      %p139 = pneg %p133
      %p140 = scmp.eq.s32.totalorder %s25, 1
      %p141 = por %p139, %p140
      %p142 = scmp.ne.s32.totalorder %s134, %s137
      %p143 = scmp.eq.s32.totalorder %s25, 0
      %p144 = por %p142, %p143
      %p145 = scmp.ne.s32.totalorder %s134, %s137
      %p146 = scmp.eq.s32.totalorder %s30, 1
      %p147 = por %p145, %p146
      %p148 = scmp.ne.s32.totalorder %s137, %s138
      %p149 = scmp.eq.s32.totalorder %s30, 0
      %p150 = por %p148, %p149
      %p151 = scmp.ne.s32.totalorder %s137, %s138
      %p152 = scmp.eq.s32.totalorder %s31, 1
      %p153 = por %p151, %p152
      %p155 = scmp.ne.s32.totalorder %s138, %s154
      %p156 = scmp.eq.s32.totalorder %s31, 0
      %p157 = por %p155, %p156
      %s158 = ssub.s32 %s25, %s32
      %p159 = scmp.eq.s32.totalorder %s158, 0
      %s161 = sadd.s32 %s160, 1
      %s162 = scalar_select %p159, %s160, %s161
      %p165 = pneg %p159
      %p166 = scmp.eq.s32.totalorder %s25, 1
      %p167 = por %p165, %p166
      %p168 = scmp.ne.s32.totalorder %s160, %s163
      %p169 = scmp.eq.s32.totalorder %s25, 0
      %p170 = por %p168, %p169
      %p171 = scmp.ne.s32.totalorder %s160, %s163
      %p172 = scmp.eq.s32.totalorder %s30, 1
      %p173 = por %p171, %p172
      %p174 = scmp.ne.s32.totalorder %s163, %s164
      %p175 = scmp.eq.s32.totalorder %s30, 0
      %p176 = por %p174, %p175
      %p177 = scmp.ne.s32.totalorder %s163, %s164
      %p178 = scmp.eq.s32.totalorder %s31, 1
      %p179 = por %p177, %p178
      %p181 = scmp.ne.s32.totalorder %s164, %s180
      %p182 = scmp.eq.s32.totalorder %s31, 0
      %p183 = por %p181, %p182
      %s184 = ssub.s32 %s25, %s32
      %p185 = scmp.eq.s32.totalorder %s184, 0
      %s187 = sadd.s32 %s186, 1
      %s188 = scalar_select %p185, %s186, %s187
      %p191 = pneg %p185
      %p192 = scmp.eq.s32.totalorder %s25, 1
      %p193 = por %p191, %p192
      %p194 = scmp.ne.s32.totalorder %s186, %s189
      %p195 = scmp.eq.s32.totalorder %s25, 0
      %p196 = por %p194, %p195
      %p197 = scmp.ne.s32.totalorder %s186, %s189
      %p198 = scmp.eq.s32.totalorder %s30, 1
      %p199 = por %p197, %p198
      %p200 = scmp.ne.s32.totalorder %s189, %s190
      %p201 = scmp.eq.s32.totalorder %s30, 0
      %p202 = por %p200, %p201
      %p203 = scmp.ne.s32.totalorder %s189, %s190
      %p204 = scmp.eq.s32.totalorder %s31, 1
      %p205 = por %p203, %p204
      %p207 = scmp.ne.s32.totalorder %s190, %s206
      %p208 = scmp.eq.s32.totalorder %s31, 0
      %p209 = por %p207, %p208
      %s210 = ssub.s32 %s25, %s32
      %p211 = scmp.eq.s32.totalorder %s210, 0
      %s213 = sadd.s32 %s212, 1
      %s214 = scalar_select %p211, %s212, %s213
      %p217 = pneg %p211
      %p218 = scmp.eq.s32.totalorder %s25, 1
      %p219 = por %p217, %p218
      %p220 = scmp.ne.s32.totalorder %s212, %s215
      %p221 = scmp.eq.s32.totalorder %s25, 0
      %p222 = por %p220, %p221
      %p223 = scmp.ne.s32.totalorder %s212, %s215
      %p224 = scmp.eq.s32.totalorder %s30, 1
      %p225 = por %p223, %p224
      %p226 = scmp.ne.s32.totalorder %s215, %s216
      %p227 = scmp.eq.s32.totalorder %s30, 0
      %p228 = por %p226, %p227
      %p229 = scmp.ne.s32.totalorder %s215, %s216
      %p230 = scmp.eq.s32.totalorder %s31, 1
      %p231 = por %p229, %p230
      %p233 = scmp.ne.s32.totalorder %s216, %s232
      %p234 = scmp.eq.s32.totalorder %s31, 0
      %p235 = por %p233, %p234
      %s236 = ssub.s32 %s25, %s32
      %p237 = scmp.eq.s32.totalorder %s236, 0
      %s239 = sadd.s32 %s238, 1
      %s240 = scalar_select %p237, %s238, %s239
      %p243 = pneg %p237
      %p244 = scmp.eq.s32.totalorder %s25, 1
      %p245 = por %p243, %p244
      %p246 = scmp.ne.s32.totalorder %s238, %s241
      %p247 = scmp.eq.s32.totalorder %s25, 0
      %p248 = por %p246, %p247
      %p249 = scmp.ne.s32.totalorder %s238, %s241
      %p250 = scmp.eq.s32.totalorder %s30, 1
      %p251 = por %p249, %p250
      %p252 = scmp.ne.s32.totalorder %s241, %s242
      %p253 = scmp.eq.s32.totalorder %s30, 0
      %p254 = por %p252, %p253
      %p255 = scmp.ne.s32.totalorder %s241, %s242
      %p256 = scmp.eq.s32.totalorder %s31, 1
      %p257 = por %p255, %p256
      %p259 = scmp.ne.s32.totalorder %s242, %s258
      %p260 = scmp.eq.s32.totalorder %s31, 0
      %p261 = por %p259, %p260
      %s262 = ssub.s32 %s25, %s32
      %p263 = scmp.eq.s32.totalorder %s262, 0
      %s265 = sadd.s32 %s264, 1
      %s266 = scalar_select %p263, %s264, %s265
      %p269 = pneg %p263
      %p270 = scmp.eq.s32.totalorder %s25, 1
      %p271 = por %p269, %p270
      %p272 = scmp.ne.s32.totalorder %s264, %s267
      %p273 = scmp.eq.s32.totalorder %s25, 0
      %p274 = por %p272, %p273
      %p275 = scmp.ne.s32.totalorder %s264, %s267
      %p276 = scmp.eq.s32.totalorder %s30, 1
      %p277 = por %p275, %p276
      %p278 = scmp.ne.s32.totalorder %s267, %s268
      %p279 = scmp.eq.s32.totalorder %s30, 0
      %p280 = por %p278, %p279
      %p281 = scmp.ne.s32.totalorder %s267, %s268
      %p282 = scmp.eq.s32.totalorder %s31, 1
      %p283 = por %p281, %p282
      %p285 = scmp.ne.s32.totalorder %s268, %s284
      %p286 = scmp.eq.s32.totalorder %s31, 0
      %p287 = por %p285, %p286
      %p288 = scmp.le.s32.totalorder 1, %s25
      %p289 = scmp.lt.s32.totalorder %s25, 3
      %p290 = pnand %p288, %p289
      %p291 = pneg %p290
      // Predicated region
      $region9: #{tpu_custom_call.1} parent=5 // pred_check
        _
      $region10: #{tpu_custom_call.1} parent=5 // pred_check_branch
        %293 = sbr.rel (%p290) target = $region12
      $region11: #{tpu_custom_call.1} parent=5 // pred_region
        %s294 = ssub.s32 %s25, 1
        // Predicated region
        $region13: #{tpu_custom_call.1} parent=11 // pred_check
          %p295 = pneg %p46
        $region14: #{tpu_custom_call.1} parent=11 // pred_check_branch
          %297 = sbr.rel (%p295) target = $region16
        $region15: #{tpu_custom_call.1} parent=11 // pred_region
          %s299 = ssub.s32 128, 128
          %300 = vsyncadd [#allocation3], %s299
          %s302 = sshll.u32 [#allocation2], 4
          %s303 = int_to_ptr.vmem [resolvable:$true] %s302
          %305 = dma.hbm_to_vmem [thread:$0]  %s0, 128, %s303, [#allocation3]
        $region16: #{tpu_custom_call.1} parent=11 // pred_fallthru
          _
      $region12: #{tpu_custom_call.1} parent=5 // pred_fallthru
        _
      %p306 = scmp.lt.s32.totalorder %s25, 2
      // Predicated region
      $region17: #{tpu_custom_call.1} parent=5 // pred_check
        %p307 = pneg %p306
      $region18: #{tpu_custom_call.1} parent=5 // pred_check_branch
        %309 = sbr.rel (%p307) target = $region20
      $region19: #{tpu_custom_call.1} parent=5 // pred_region
        // Predicated region
        $region21: #{tpu_custom_call.1} parent=19 // pred_check
          %p310 = pneg %p66
        $region22: #{tpu_custom_call.1} parent=19 // pred_check_branch
          %312 = sbr.rel (%p310) target = $region24
        $region23: #{tpu_custom_call.1} parent=19 // pred_region
          %s313 = sand.u32 %s25, 1
          %s314 = scalar_lea.sflag [#allocation6], %s313
          %s315 = sand.u32 %s56, 1
          %s316 = smul.addr %s315, 16
          %s317 = scalar_lea.vmem [#allocation5], %s316
          %s319 = ssub.s32 256, 256
          %320 = vsyncadd %s314, %s319
          %s321 = smul.addr %s25, 2
          %s322 = smul.addr %s321, 128
          %s323 = scalar_lea.hbm %s1, %s322
          %s324 = sshll.u32 %s317, 4
          %s325 = int_to_ptr.vmem [resolvable:$true] %s324
          %330 = dma.hbm_to_vmem [thread:$0]  %s323, 256, %s325, %s314, 128, 128, 8
        $region24: #{tpu_custom_call.1} parent=19 // pred_fallthru
          _
        // Predicated region
        $region25: #{tpu_custom_call.1} parent=19 // pred_check
          %p331 = pneg %p92
        $region26: #{tpu_custom_call.1} parent=19 // pred_check_branch
          %333 = sbr.rel (%p331) target = $region28
        $region27: #{tpu_custom_call.1} parent=19 // pred_region
          %s334 = sand.u32 %s25, 1
          %s335 = scalar_lea.sflag [#allocation6], %s334
          %s336 = sand.u32 %s82, 1
          %s337 = scalar_lea.vmem [#allocation7], %s336
          %s339 = ssub.s32 16, 16
          %340 = vsyncadd %s335, %s339
          %s341 = smul.addr %s25, 16
          %s342 = scalar_lea.hbm %s2, %s341
          %s344 = sshll.u32 %s337, 4
          %s345 = int_to_ptr.vmem [resolvable:$true] %s344
          %347 = dma.hbm_to_vmem [thread:$0]  %s342, 16, %s345, %s335
        $region28: #{tpu_custom_call.1} parent=19 // pred_fallthru
          _
        // Predicated region
        $region29: #{tpu_custom_call.1} parent=19 // pred_check
          %p348 = pneg %p118
        $region30: #{tpu_custom_call.1} parent=19 // pred_check_branch
          %350 = sbr.rel (%p348) target = $region32
        $region31: #{tpu_custom_call.1} parent=19 // pred_region
          %s351 = sand.u32 %s25, 1
          %s352 = scalar_lea.sflag [#allocation9], %s351
          %s353 = sand.u32 %s108, 1
          %s354 = smul.addr %s353, 64
          %s355 = scalar_lea.vmem [#allocation8], %s354
          %s357 = ssub.s32 1024, 1024
          %358 = vsyncadd %s352, %s357
          %s359 = smul.addr %s25, 8
          %s360 = smul.addr %s359, 128
          %s361 = scalar_lea.hbm %s3, %s360
          %s362 = sshll.u32 %s355, 4
          %s363 = int_to_ptr.vmem [resolvable:$true] %s362
          %368 = dma.hbm_to_vmem [thread:$0]  %s361, 1024, %s363, %s352, 128, 128, 8
        $region32: #{tpu_custom_call.1} parent=19 // pred_fallthru
          _
        // Predicated region
        $region33: #{tpu_custom_call.1} parent=19 // pred_check
          %p369 = pneg %p144
        $region34: #{tpu_custom_call.1} parent=19 // pred_check_branch
          %371 = sbr.rel (%p369) target = $region36
        $region35: #{tpu_custom_call.1} parent=19 // pred_region
          %p372 = scmp.lt.s32.totalorder %s25, 1
          %s373 = scalar_select %p372, %s25, 1
          %s374 = smul.addr %s373, 2
          %s375 = scalar_lea.vmem %s4, %s374
        $region36: #{tpu_custom_call.1} parent=19 // pred_fallthru
          _
        // Predicated region
        $region37: #{tpu_custom_call.1} parent=19 // pred_check
          %p376 = pneg %p170
        $region38: #{tpu_custom_call.1} parent=19 // pred_check_branch
          %378 = sbr.rel (%p376) target = $region40
        $region39: #{tpu_custom_call.1} parent=19 // pred_region
          %s379 = sand.u32 %s25, 1
          %s380 = scalar_lea.sflag [#allocation9], %s379
          %s381 = sand.u32 %s160, 1
          %s382 = smul.addr %s381, 64
          %s383 = scalar_lea.vmem [#allocation10], %s382
          %s385 = ssub.s32 1024, 1024
          %386 = vsyncadd %s380, %s385
          %s387 = smul.addr %s25, 8
          %s388 = smul.addr %s387, 128
          %s389 = scalar_lea.hbm %s5, %s388
          %s390 = sshll.u32 %s383, 4
          %s391 = int_to_ptr.vmem [resolvable:$true] %s390
          %396 = dma.hbm_to_vmem [thread:$0]  %s389, 1024, %s391, %s380, 128, 128, 8
        $region40: #{tpu_custom_call.1} parent=19 // pred_fallthru
          _
        // Predicated region
        $region41: #{tpu_custom_call.1} parent=19 // pred_check
          %p397 = pneg %p196
        $region42: #{tpu_custom_call.1} parent=19 // pred_check_branch
          %399 = sbr.rel (%p397) target = $region44
        $region43: #{tpu_custom_call.1} parent=19 // pred_region
          %p400 = scmp.lt.s32.totalorder %s25, 1
          %s401 = scalar_select %p400, %s25, 1
          %s402 = smul.addr %s401, 2
          %s403 = scalar_lea.vmem %s6, %s402
        $region44: #{tpu_custom_call.1} parent=19 // pred_fallthru
          _
        // Predicated region
        $region45: #{tpu_custom_call.1} parent=19 // pred_check
          %p404 = pneg %p222
        $region46: #{tpu_custom_call.1} parent=19 // pred_check_branch
          %406 = sbr.rel (%p404) target = $region48
        $region47: #{tpu_custom_call.1} parent=19 // pred_region
          %p407 = scmp.lt.s32.totalorder %s25, 1
          %s408 = scalar_select %p407, %s25, 1
          %s409 = smul.addr %s408, 2
          %s410 = scalar_lea.vmem %s7, %s409
        $region48: #{tpu_custom_call.1} parent=19 // pred_fallthru
          _
        // Predicated region
        $region49: #{tpu_custom_call.1} parent=19 // pred_check
          %p411 = pneg %p248
        $region50: #{tpu_custom_call.1} parent=19 // pred_check_branch
          %413 = sbr.rel (%p411) target = $region52
        $region51: #{tpu_custom_call.1} parent=19 // pred_region
          %p414 = scmp.lt.s32.totalorder %s25, 1
          %s415 = scalar_select %p414, %s25, 1
          %s416 = smul.addr %s415, 2
          %s417 = scalar_lea.vmem %s8, %s416
        $region52: #{tpu_custom_call.1} parent=19 // pred_fallthru
          _
      $region20: #{tpu_custom_call.1} parent=5 // pred_fallthru
        _
      %p418 = scmp.le.s32.totalorder 1, %s25
      %p419 = scmp.lt.s32.totalorder %s25, 3
      %p420 = pnand %p418, %p419
      %p421 = pneg %p420
      // Predicated region
      $region53: #{tpu_custom_call.1} parent=5 // pred_check
        _
      $region54: #{tpu_custom_call.1} parent=5 // pred_check_branch
        %423 = sbr.rel (%p420) target = $region56
      $region55: #{tpu_custom_call.1} parent=5 // pred_region
        %s424 = ssub.s32 %s25, 1
        // Predicated region
        $region57: #{tpu_custom_call.1} parent=55 // pred_check
          %p425 = pneg %p46
        $region58: #{tpu_custom_call.1} parent=55 // pred_check_branch
          %427 = sbr.rel (%p425) target = $region60
        $region59: #{tpu_custom_call.1} parent=55 // pred_region
          %428 = dma.done [#allocation3], 128
        $region60: #{tpu_custom_call.1} parent=55 // pred_fallthru
          _
        %s429 = sand.u32 %s30, 1
        %s430 = scalar_lea.sflag [#allocation6], %s429
        %s431 = sand.u32 %s59, 1
        %s432 = smul.addr %s431, 16
        %s433 = scalar_lea.vmem [#allocation5], %s432
        // Predicated region
        $region61: #{tpu_custom_call.1} parent=55 // pred_check
          %p434 = pneg %p72
        $region62: #{tpu_custom_call.1} parent=55 // pred_check_branch
          %436 = sbr.rel (%p434) target = $region64
        $region63: #{tpu_custom_call.1} parent=55 // pred_region
          %437 = dma.done %s430, 256
        $region64: #{tpu_custom_call.1} parent=55 // pred_fallthru
          _
        %s438 = sand.u32 %s30, 1
        %s439 = scalar_lea.sflag [#allocation6], %s438
        %s440 = sand.u32 %s85, 1
        %s441 = scalar_lea.vmem [#allocation7], %s440
        // Predicated region
        $region65: #{tpu_custom_call.1} parent=55 // pred_check
          %p442 = pneg %p98
        $region66: #{tpu_custom_call.1} parent=55 // pred_check_branch
          %444 = sbr.rel (%p442) target = $region68
        $region67: #{tpu_custom_call.1} parent=55 // pred_region
          %445 = dma.done %s439, 16
        $region68: #{tpu_custom_call.1} parent=55 // pred_fallthru
          _
        %s446 = sand.u32 %s30, 1
        %s447 = scalar_lea.sflag [#allocation9], %s446
        %s448 = sand.u32 %s111, 1
        %s449 = smul.addr %s448, 64
        %s450 = scalar_lea.vmem [#allocation8], %s449
        // Predicated region
        $region69: #{tpu_custom_call.1} parent=55 // pred_check
          %p451 = pneg %p124
        $region70: #{tpu_custom_call.1} parent=55 // pred_check_branch
          %453 = sbr.rel (%p451) target = $region72
        $region71: #{tpu_custom_call.1} parent=55 // pred_region
          %454 = dma.done %s447, 1024
        $region72: #{tpu_custom_call.1} parent=55 // pred_fallthru
          _
        %s455 = sand.u32 %s30, 1
        %s456 = scalar_lea.sflag [#allocation9], %s455
        %s457 = sand.u32 %s163, 1
        %s458 = smul.addr %s457, 64
        %s459 = scalar_lea.vmem [#allocation10], %s458
        // Predicated region
        $region73: #{tpu_custom_call.1} parent=55 // pred_check
          %p460 = pneg %p176
        $region74: #{tpu_custom_call.1} parent=55 // pred_check_branch
          %462 = sbr.rel (%p460) target = $region76
        $region75: #{tpu_custom_call.1} parent=55 // pred_region
          %463 = dma.done %s456, 1024
        $region76: #{tpu_custom_call.1} parent=55 // pred_fallthru
          _
        %p464 = pneg %p46
        %p465 = pneg %p43
        %s466 = sand.u32 %s30, 1
        %s467 = scalar_lea.sflag [#allocation6], %s466
        %s468 = sand.u32 %s59, 1
        %s469 = smul.addr %s468, 16
        %s470 = scalar_lea.vmem [#allocation5], %s469
        %p471 = pneg %p72
        %p472 = pneg %p69
        %s473 = sand.u32 %s30, 1
        %s474 = scalar_lea.sflag [#allocation6], %s473
        %s475 = sand.u32 %s85, 1
        %s476 = scalar_lea.vmem [#allocation7], %s475
        %p477 = pneg %p98
        %p478 = pneg %p95
        %s479 = sand.u32 %s30, 1
        %s480 = scalar_lea.sflag [#allocation9], %s479
        %s481 = sand.u32 %s111, 1
        %s482 = smul.addr %s481, 64
        %s483 = scalar_lea.vmem [#allocation8], %s482
        %p484 = pneg %p124
        %p485 = pneg %p121
        %p486 = scmp.lt.s32.totalorder %s30, 1
        %s487 = scalar_select %p486, %s30, 1
        %s488 = smul.addr %s487, 2
        %s489 = scalar_lea.vmem %s4, %s488
        %p490 = pneg %p150
        %p491 = pneg %p147
        %s492 = sand.u32 %s30, 1
        %s493 = scalar_lea.sflag [#allocation9], %s492
        %s494 = sand.u32 %s163, 1
        %s495 = smul.addr %s494, 64
        %s496 = scalar_lea.vmem [#allocation10], %s495
        %p497 = pneg %p176
        %p498 = pneg %p173
        %p499 = scmp.lt.s32.totalorder %s30, 1
        %s500 = scalar_select %p499, %s30, 1
        %s501 = smul.addr %s500, 2
        %s502 = scalar_lea.vmem %s6, %s501
        %p503 = pneg %p202
        %p504 = pneg %p199
        %p505 = scmp.lt.s32.totalorder %s30, 1
        %s506 = scalar_select %p505, %s30, 1
        %s507 = smul.addr %s506, 2
        %s508 = scalar_lea.vmem %s7, %s507
        %p509 = pneg %p228
        %p510 = pneg %p225
        %p511 = scmp.lt.s32.totalorder %s30, 1
        %s512 = scalar_select %p511, %s30, 1
        %s513 = smul.addr %s512, 2
        %s514 = scalar_lea.vmem %s8, %s513
        %p515 = pneg %p254
        %p516 = pneg %p251
        %p517 = pneg %p280
        %p518 = pneg %p277
        %s519 = sand.u32 %s267, 1
        %s520 = scalar_lea.sflag [#allocation4], %s519
        %s521 = sand.u32 %s267, 1
        %s522 = smul.addr %s521, 2
        %s523 = scalar_lea.vmem [#allocation11], %s522
        %p524 = scmp.lt.s32.totalorder %s30, 1
        %s525 = scalar_select %p524, %s30, 1
        %s526 = smul.addr %s525, 2
        %s527 = scalar_lea.vmem %s4, %s526
        %p528 = scmp.lt.s32.totalorder %s30, 1
        %s529 = scalar_select %p528, %s30, 1
        %s530 = smul.addr %s529, 2
        %s531 = scalar_lea.vmem %s6, %s530
        %p532 = scmp.lt.s32.totalorder %s30, 1
        %s533 = scalar_select %p532, %s30, 1
        %s534 = smul.addr %s533, 2
        %s535 = scalar_lea.vmem %s7, %s534
        %p536 = scmp.lt.s32.totalorder %s30, 1
        %s537 = scalar_select %p536, %s30, 1
        %s538 = smul.addr %s537, 2
        %s539 = scalar_lea.vmem %s8, %s538
        %v540 = vld [vmem:[#allocation2] sm:$0xff]
        %v541 = vld [vmem:[%s433] sm:$0xff]
        %v542 = vld [vmem:[%s433 + $0x8] sm:$0xff]
        %v543 = vld [vmem:[%s441] sm:$0x1]
        %v545 = vlaneseq
        %v546 = vshrl.u32 %v545, 7
        %v547 = vsub.s32 0, %v546
        %v548 = vrot.slane %v543, %v547
        %vm550 = vcmask 130048
        %v552 = vsel %vm550, %v540, 0
        %554 = vmatprep.subr.mxu0 0.0
        %555 = vmatpush1.msra.mxu0 %v541
        %556 = vmatprep.subr.mxu0 0.0
        %557 = vmatpush1.msra.mxu0 %v542
        %558 = vmatprep.subr.mxu0 0.0
        %559 = vmatpush1.msra.mxu0 0.0
        %560 = vmatprep.subr.mxu0 0.0
        %561 = vmatpush1.msra.mxu0 0.0
        %562 = vmatprep.subr.mxu0 0.0
        %563 = vmatpush1.msra.mxu0 0.0
        %564 = vmatprep.subr.mxu0 0.0
        %565 = vmatpush1.msra.mxu0 0.0
        %566 = vmatprep.subr.mxu0 0.0
        %567 = vmatpush1.msra.mxu0 0.0
        %568 = vmatprep.subr.mxu0 0.0
        %569 = vmatpush1.msra.mxu0 0.0
        %570 = vmatprep.subr.mxu0 0.0
        %571 = vmatpush1.msra.mxu0 0.0
        %572 = vmatprep.subr.mxu0 0.0
        %573 = vmatpush1.msra.mxu0 0.0
        %574 = vmatprep.subr.mxu0 0.0
        %575 = vmatpush1.msra.mxu0 0.0
        %576 = vmatprep.subr.mxu0 0.0
        %577 = vmatpush1.msra.mxu0 0.0
        %578 = vmatprep.subr.mxu0 0.0
        %579 = vmatpush1.msra.mxu0 0.0
        %580 = vmatprep.subr.mxu0 0.0
        %581 = vmatpush1.msra.mxu0 0.0
        %582 = vmatprep.subr.mxu0 0.0
        %583 = vmatpush1.msra.mxu0 0.0
        %584 = vmatprep.subr.mxu0 0.0
        %585 = vmatpush1.msra.mxu0 0.0
        %586 = vmatprep.subr.mxu0 0.0
        %587 = vmatpush1.msra.mxu0 0.0
        %588 = vmatprep.subr.mxu0 0.0
        %589 = vmatpush1.msra.mxu0 0.0
        %590 = vmatprep.subr.mxu0 0.0
        %591 = vmatpush1.msra.mxu0 0.0
        %592 = vmatprep.subr.mxu0 0.0
        %593 = vmatpush1.msra.mxu0 0.0
        %594 = vmatprep.subr.mxu0 0.0
        %595 = vmatpush1.msra.mxu0 0.0
        %596 = vmatprep.subr.mxu0 0.0
        %597 = vmatpush1.msra.mxu0 0.0
        %598 = vmatprep.subr.mxu0 0.0
        %599 = vmatpush1.msra.mxu0 0.0
        %600 = vmatprep.subr.mxu0 0.0
        %601 = vmatpush1.msra.mxu0 0.0
        %602 = vmatprep.subr.mxu0 0.0
        %603 = vmatpush1.msra.mxu0 0.0
        %604 = vmatprep.subr.mxu0 0.0
        %605 = vmatpush1.msra.mxu0 0.0
        %606 = vmatprep.subr.mxu0 0.0
        %607 = vmatpush1.msra.mxu0 0.0
        %608 = vmatprep.subr.mxu0 0.0
        %609 = vmatpush1.msra.mxu0 0.0
        %610 = vmatprep.subr.mxu0 0.0
        %611 = vmatpush1.msra.mxu0 0.0
        %612 = vmatprep.subr.mxu0 0.0
        %613 = vmatpush1.msra.mxu0 0.0
        %614 = vmatprep.subr.mxu0 0.0
        %615 = vmatpush1.msra.mxu0 0.0
        %616 = vmatprep.subr.mxu0 0.0
        %617 = vmatpush1.msra.mxu0 0.0
        %618 = vmatprep.mubr.f32.mxu0 0.0
        %619 = vmatmul.mubr.f32.gmra.mrb[0].mxu0 %v552
        %v620 = vpop.f32.mrb[0].mxu0
        %v621 = vadd.f32 %v548, %v620
        %v622 = vpop.f32.mrb[0].mxu0
        %623 = vdwg.mxu0
        %v624 = vmax.f32 %v621, 0.0
        %v625 = vld [vmem:[%s450] sm:$0xff]
        %v626 = vld [vmem:[%s450 + $0x8] sm:$0xff]
        %v627 = vld [vmem:[%s450 + $0x10] sm:$0xff]
        %v628 = vld [vmem:[%s450 + $0x18] sm:$0xff]
        %v629 = vld [vmem:[%s527] sm:$0x1]
        %v631 = vlaneseq
        %v632 = vshrl.u32 %v631, 7
        %v633 = vsub.s32 0, %v632
        %v634 = vrot.slane %v629, %v633
        %vm636 = vcmask 261120
        %v638 = vsel %vm636, %v624, 0
        %640 = vmatprep.subr.mxu0 0.0
        %641 = vmatpush1.msra.mxu0 %v625
        %642 = vmatprep.subr.mxu0 0.0
        %643 = vmatpush1.msra.mxu0 %v626
        %644 = vmatprep.subr.mxu0 0.0
        %645 = vmatpush1.msra.mxu0 %v627
        %646 = vmatprep.subr.mxu0 0.0
        %647 = vmatpush1.msra.mxu0 %v628
        %648 = vmatprep.subr.mxu0 0.0
        %649 = vmatpush1.msra.mxu0 0.0
        %650 = vmatprep.subr.mxu0 0.0
        %651 = vmatpush1.msra.mxu0 0.0
        %652 = vmatprep.subr.mxu0 0.0
        %653 = vmatpush1.msra.mxu0 0.0
        %654 = vmatprep.subr.mxu0 0.0
        %655 = vmatpush1.msra.mxu0 0.0
        %656 = vmatprep.subr.mxu0 0.0
        %657 = vmatpush1.msra.mxu0 0.0
        %658 = vmatprep.subr.mxu0 0.0
        %659 = vmatpush1.msra.mxu0 0.0
        %660 = vmatprep.subr.mxu0 0.0
        %661 = vmatpush1.msra.mxu0 0.0
        %662 = vmatprep.subr.mxu0 0.0
        %663 = vmatpush1.msra.mxu0 0.0
        %664 = vmatprep.subr.mxu0 0.0
        %665 = vmatpush1.msra.mxu0 0.0
        %666 = vmatprep.subr.mxu0 0.0
        %667 = vmatpush1.msra.mxu0 0.0
        %668 = vmatprep.subr.mxu0 0.0
        %669 = vmatpush1.msra.mxu0 0.0
        %670 = vmatprep.subr.mxu0 0.0
        %671 = vmatpush1.msra.mxu0 0.0
        %672 = vmatprep.subr.mxu0 0.0
        %673 = vmatpush1.msra.mxu0 0.0
        %674 = vmatprep.subr.mxu0 0.0
        %675 = vmatpush1.msra.mxu0 0.0
        %676 = vmatprep.subr.mxu0 0.0
        %677 = vmatpush1.msra.mxu0 0.0
        %678 = vmatprep.subr.mxu0 0.0
        %679 = vmatpush1.msra.mxu0 0.0
        %680 = vmatprep.subr.mxu0 0.0
        %681 = vmatpush1.msra.mxu0 0.0
        %682 = vmatprep.subr.mxu0 0.0
        %683 = vmatpush1.msra.mxu0 0.0
        %684 = vmatprep.subr.mxu0 0.0
        %685 = vmatpush1.msra.mxu0 0.0
        %686 = vmatprep.subr.mxu0 0.0
        %687 = vmatpush1.msra.mxu0 0.0
        %688 = vmatprep.subr.mxu0 0.0
        %689 = vmatpush1.msra.mxu0 0.0
        %690 = vmatprep.subr.mxu0 0.0
        %691 = vmatpush1.msra.mxu0 0.0
        %692 = vmatprep.subr.mxu0 0.0
        %693 = vmatpush1.msra.mxu0 0.0
        %694 = vmatprep.subr.mxu0 0.0
        %695 = vmatpush1.msra.mxu0 0.0
        %696 = vmatprep.subr.mxu0 0.0
        %697 = vmatpush1.msra.mxu0 0.0
        %698 = vmatprep.subr.mxu0 0.0
        %699 = vmatpush1.msra.mxu0 0.0
        %700 = vmatprep.subr.mxu0 0.0
        %701 = vmatpush1.msra.mxu0 0.0
        %702 = vmatprep.subr.mxu0 0.0
        %703 = vmatpush1.msra.mxu0 0.0
        %704 = vmatprep.mubr.f32.mxu0 0.0
        %705 = vmatmul.mubr.f32.gmra.mrb[0].mxu0 %v638
        %v706 = vpop.f32.mrb[0].mxu0
        %v707 = vadd.f32 %v634, %v706
        %v708 = vpop.f32.mrb[0].mxu0
        %709 = vdwg.mxu0
        %v710 = vmax.f32 %v707, 0.0
        %v711 = vld [vmem:[%s459] sm:$0xff]
        %v712 = vld [vmem:[%s459 + $0x8] sm:$0xff]
        %v713 = vld [vmem:[%s459 + $0x10] sm:$0xff]
        %v714 = vld [vmem:[%s459 + $0x18] sm:$0xff]
        %v715 = vld [vmem:[%s531] sm:$0x1]
        %v717 = vlaneseq
        %v718 = vshrl.u32 %v717, 7
        %v719 = vsub.s32 0, %v718
        %v720 = vrot.slane %v715, %v719
        %v723 = vsel %vm636, %v710, 0
        %725 = vmatprep.subr.mxu0 0.0
        %726 = vmatpush1.msra.mxu0 %v711
        %727 = vmatprep.subr.mxu0 0.0
        %728 = vmatpush1.msra.mxu0 %v712
        %729 = vmatprep.subr.mxu0 0.0
        %730 = vmatpush1.msra.mxu0 %v713
        %731 = vmatprep.subr.mxu0 0.0
        %732 = vmatpush1.msra.mxu0 %v714
        %733 = vmatprep.subr.mxu0 0.0
        %734 = vmatpush1.msra.mxu0 0.0
        %735 = vmatprep.subr.mxu0 0.0
        %736 = vmatpush1.msra.mxu0 0.0
        %737 = vmatprep.subr.mxu0 0.0
        %738 = vmatpush1.msra.mxu0 0.0
        %739 = vmatprep.subr.mxu0 0.0
        %740 = vmatpush1.msra.mxu0 0.0
        %741 = vmatprep.subr.mxu0 0.0
        %742 = vmatpush1.msra.mxu0 0.0
        %743 = vmatprep.subr.mxu0 0.0
        %744 = vmatpush1.msra.mxu0 0.0
        %745 = vmatprep.subr.mxu0 0.0
        %746 = vmatpush1.msra.mxu0 0.0
        %747 = vmatprep.subr.mxu0 0.0
        %748 = vmatpush1.msra.mxu0 0.0
        %749 = vmatprep.subr.mxu0 0.0
        %750 = vmatpush1.msra.mxu0 0.0
        %751 = vmatprep.subr.mxu0 0.0
        %752 = vmatpush1.msra.mxu0 0.0
        %753 = vmatprep.subr.mxu0 0.0
        %754 = vmatpush1.msra.mxu0 0.0
        %755 = vmatprep.subr.mxu0 0.0
        %756 = vmatpush1.msra.mxu0 0.0
        %757 = vmatprep.subr.mxu0 0.0
        %758 = vmatpush1.msra.mxu0 0.0
        %759 = vmatprep.subr.mxu0 0.0
        %760 = vmatpush1.msra.mxu0 0.0
        %761 = vmatprep.subr.mxu0 0.0
        %762 = vmatpush1.msra.mxu0 0.0
        %763 = vmatprep.subr.mxu0 0.0
        %764 = vmatpush1.msra.mxu0 0.0
        %765 = vmatprep.subr.mxu0 0.0
        %766 = vmatpush1.msra.mxu0 0.0
        %767 = vmatprep.subr.mxu0 0.0
        %768 = vmatpush1.msra.mxu0 0.0
        %769 = vmatprep.subr.mxu0 0.0
        %770 = vmatpush1.msra.mxu0 0.0
        %771 = vmatprep.subr.mxu0 0.0
        %772 = vmatpush1.msra.mxu0 0.0
        %773 = vmatprep.subr.mxu0 0.0
        %774 = vmatpush1.msra.mxu0 0.0
        %775 = vmatprep.subr.mxu0 0.0
        %776 = vmatpush1.msra.mxu0 0.0
        %777 = vmatprep.subr.mxu0 0.0
        %778 = vmatpush1.msra.mxu0 0.0
        %779 = vmatprep.subr.mxu0 0.0
        %780 = vmatpush1.msra.mxu0 0.0
        %781 = vmatprep.subr.mxu0 0.0
        %782 = vmatpush1.msra.mxu0 0.0
        %783 = vmatprep.subr.mxu0 0.0
        %784 = vmatpush1.msra.mxu0 0.0
        %785 = vmatprep.subr.mxu0 0.0
        %786 = vmatpush1.msra.mxu0 0.0
        %787 = vmatprep.subr.mxu0 0.0
        %788 = vmatpush1.msra.mxu0 0.0
        %789 = vmatprep.mubr.f32.mxu0 0.0
        %790 = vmatmul.mubr.f32.gmra.mrb[0].mxu0 %v723
        %v791 = vpop.f32.mrb[0].mxu0
        %v792 = vadd.f32 %v720, %v791
        %v793 = vpop.f32.mrb[0].mxu0
        %794 = vdwg.mxu0
        %v795 = vmax.f32 %v792, 0.0
        %s796 = scalar_lea.vmem %s450, 32 [#allocation8]
        %v797 = vld [vmem:[%s796] sm:$0xff]
        %v798 = vld [vmem:[%s796 + $0x8] sm:$0xff]
        %v799 = vld [vmem:[%s796 + $0x10] sm:$0xff]
        %v800 = vld [vmem:[%s796 + $0x18] sm:$0xff]
        %s801 = scalar_lea.vmem %s527, 1
        %v802 = vld [vmem:[%s801] sm:$0x1]
        %v804 = vlaneseq
        %v805 = vshrl.u32 %v804, 7
        %v806 = vsub.s32 0, %v805
        %v807 = vrot.slane %v802, %v806
        %809 = vrot.lane.b32.xlu0 %v624, 96
        %v810 = vpop.permute.xlu0 %809
        %v811 = vsel %vm636, %v810, 0
        %813 = vmatprep.subr.mxu0 0.0
        %814 = vmatpush1.msra.mxu0 %v797
        %815 = vmatprep.subr.mxu0 0.0
        %816 = vmatpush1.msra.mxu0 %v798
        %817 = vmatprep.subr.mxu0 0.0
        %818 = vmatpush1.msra.mxu0 %v799
        %819 = vmatprep.subr.mxu0 0.0
        %820 = vmatpush1.msra.mxu0 %v800
        %821 = vmatprep.subr.mxu0 0.0
        %822 = vmatpush1.msra.mxu0 0.0
        %823 = vmatprep.subr.mxu0 0.0
        %824 = vmatpush1.msra.mxu0 0.0
        %825 = vmatprep.subr.mxu0 0.0
        %826 = vmatpush1.msra.mxu0 0.0
        %827 = vmatprep.subr.mxu0 0.0
        %828 = vmatpush1.msra.mxu0 0.0
        %829 = vmatprep.subr.mxu0 0.0
        %830 = vmatpush1.msra.mxu0 0.0
        %831 = vmatprep.subr.mxu0 0.0
        %832 = vmatpush1.msra.mxu0 0.0
        %833 = vmatprep.subr.mxu0 0.0
        %834 = vmatpush1.msra.mxu0 0.0
        %835 = vmatprep.subr.mxu0 0.0
        %836 = vmatpush1.msra.mxu0 0.0
        %837 = vmatprep.subr.mxu0 0.0
        %838 = vmatpush1.msra.mxu0 0.0
        %839 = vmatprep.subr.mxu0 0.0
        %840 = vmatpush1.msra.mxu0 0.0
        %841 = vmatprep.subr.mxu0 0.0
        %842 = vmatpush1.msra.mxu0 0.0
        %843 = vmatprep.subr.mxu0 0.0
        %844 = vmatpush1.msra.mxu0 0.0
        %845 = vmatprep.subr.mxu0 0.0
        %846 = vmatpush1.msra.mxu0 0.0
        %847 = vmatprep.subr.mxu0 0.0
        %848 = vmatpush1.msra.mxu0 0.0
        %849 = vmatprep.subr.mxu0 0.0
        %850 = vmatpush1.msra.mxu0 0.0
        %851 = vmatprep.subr.mxu0 0.0
        %852 = vmatpush1.msra.mxu0 0.0
        %853 = vmatprep.subr.mxu0 0.0
        %854 = vmatpush1.msra.mxu0 0.0
        %855 = vmatprep.subr.mxu0 0.0
        %856 = vmatpush1.msra.mxu0 0.0
        %857 = vmatprep.subr.mxu0 0.0
        %858 = vmatpush1.msra.mxu0 0.0
        %859 = vmatprep.subr.mxu0 0.0
        %860 = vmatpush1.msra.mxu0 0.0
        %861 = vmatprep.subr.mxu0 0.0
        %862 = vmatpush1.msra.mxu0 0.0
        %863 = vmatprep.subr.mxu0 0.0
        %864 = vmatpush1.msra.mxu0 0.0
        %865 = vmatprep.subr.mxu0 0.0
        %866 = vmatpush1.msra.mxu0 0.0
        %867 = vmatprep.subr.mxu0 0.0
        %868 = vmatpush1.msra.mxu0 0.0
        %869 = vmatprep.subr.mxu0 0.0
        %870 = vmatpush1.msra.mxu0 0.0
        %871 = vmatprep.subr.mxu0 0.0
        %872 = vmatpush1.msra.mxu0 0.0
        %873 = vmatprep.subr.mxu0 0.0
        %874 = vmatpush1.msra.mxu0 0.0
        %875 = vmatprep.subr.mxu0 0.0
        %876 = vmatpush1.msra.mxu0 0.0
        %877 = vmatprep.mubr.f32.mxu0 0.0
        %878 = vmatmul.mubr.f32.gmra.mrb[0].mxu0 %v811
        %v879 = vpop.f32.mrb[0].mxu0
        %v880 = vadd.f32 %v807, %v879
        %v881 = vpop.f32.mrb[0].mxu0
        %882 = vdwg.mxu0
        %v883 = vmax.f32 %v880, 0.0
        %s884 = scalar_lea.vmem %s459, 32 [#allocation10]
        %v885 = vld [vmem:[%s884] sm:$0xff]
        %v886 = vld [vmem:[%s884 + $0x8] sm:$0xff]
        %v887 = vld [vmem:[%s884 + $0x10] sm:$0xff]
        %v888 = vld [vmem:[%s884 + $0x18] sm:$0xff]
        %s889 = scalar_lea.vmem %s531, 1
        %v890 = vld [vmem:[%s889] sm:$0x1]
        %v892 = vlaneseq
        %v893 = vshrl.u32 %v892, 7
        %v894 = vsub.s32 0, %v893
        %v895 = vrot.slane %v890, %v894
        %v898 = vsel %vm636, %v883, 0
        %900 = vmatprep.subr.mxu0 0.0
        %901 = vmatpush1.msra.mxu0 %v885
        %902 = vmatprep.subr.mxu0 0.0
        %903 = vmatpush1.msra.mxu0 %v886
        %904 = vmatprep.subr.mxu0 0.0
        %905 = vmatpush1.msra.mxu0 %v887
        %906 = vmatprep.subr.mxu0 0.0
        %907 = vmatpush1.msra.mxu0 %v888
        %908 = vmatprep.subr.mxu0 0.0
        %909 = vmatpush1.msra.mxu0 0.0
        %910 = vmatprep.subr.mxu0 0.0
        %911 = vmatpush1.msra.mxu0 0.0
        %912 = vmatprep.subr.mxu0 0.0
        %913 = vmatpush1.msra.mxu0 0.0
        %914 = vmatprep.subr.mxu0 0.0
        %915 = vmatpush1.msra.mxu0 0.0
        %916 = vmatprep.subr.mxu0 0.0
        %917 = vmatpush1.msra.mxu0 0.0
        %918 = vmatprep.subr.mxu0 0.0
        %919 = vmatpush1.msra.mxu0 0.0
        %920 = vmatprep.subr.mxu0 0.0
        %921 = vmatpush1.msra.mxu0 0.0
        %922 = vmatprep.subr.mxu0 0.0
        %923 = vmatpush1.msra.mxu0 0.0
        %924 = vmatprep.subr.mxu0 0.0
        %925 = vmatpush1.msra.mxu0 0.0
        %926 = vmatprep.subr.mxu0 0.0
        %927 = vmatpush1.msra.mxu0 0.0
        %928 = vmatprep.subr.mxu0 0.0
        %929 = vmatpush1.msra.mxu0 0.0
        %930 = vmatprep.subr.mxu0 0.0
        %931 = vmatpush1.msra.mxu0 0.0
        %932 = vmatprep.subr.mxu0 0.0
        %933 = vmatpush1.msra.mxu0 0.0
        %934 = vmatprep.subr.mxu0 0.0
        %935 = vmatpush1.msra.mxu0 0.0
        %936 = vmatprep.subr.mxu0 0.0
        %937 = vmatpush1.msra.mxu0 0.0
        %938 = vmatprep.subr.mxu0 0.0
        %939 = vmatpush1.msra.mxu0 0.0
        %940 = vmatprep.subr.mxu0 0.0
        %941 = vmatpush1.msra.mxu0 0.0
        %942 = vmatprep.subr.mxu0 0.0
        %943 = vmatpush1.msra.mxu0 0.0
        %944 = vmatprep.subr.mxu0 0.0
        %945 = vmatpush1.msra.mxu0 0.0
        %946 = vmatprep.subr.mxu0 0.0
        %947 = vmatpush1.msra.mxu0 0.0
        %948 = vmatprep.subr.mxu0 0.0
        %949 = vmatpush1.msra.mxu0 0.0
        %950 = vmatprep.subr.mxu0 0.0
        %951 = vmatpush1.msra.mxu0 0.0
        %952 = vmatprep.subr.mxu0 0.0
        %953 = vmatpush1.msra.mxu0 0.0
        %954 = vmatprep.subr.mxu0 0.0
        %955 = vmatpush1.msra.mxu0 0.0
        %956 = vmatprep.subr.mxu0 0.0
        %957 = vmatpush1.msra.mxu0 0.0
        %958 = vmatprep.subr.mxu0 0.0
        %959 = vmatpush1.msra.mxu0 0.0
        %960 = vmatprep.subr.mxu0 0.0
        %961 = vmatpush1.msra.mxu0 0.0
        %962 = vmatprep.subr.mxu0 0.0
        %963 = vmatpush1.msra.mxu0 0.0
        %964 = vmatprep.mubr.f32.mxu0 0.0
        %965 = vmatmul.mubr.f32.gmra.mrb[0].mxu0 %v898
        %v966 = vpop.f32.mrb[0].mxu0
        %v967 = vadd.f32 %v895, %v966
        %v968 = vpop.f32.mrb[0].mxu0
        %969 = vdwg.mxu0
        %v970 = vmax.f32 %v967, 0.0
        %v971 = vld [vmem:[%s535] sm:$0x3]
        %v974 = vunpack.c.l.s4 1966171168
        %v975 = vunpack.c.0.s8 %v974
        %v976 = vlaneseq
        %v977 = vshrl.u32 %v976, 7
        %v978 = vsub.s32 %v975, %v977
        %v979 = vrot.slane %v971, %v978
        %v980 = vcombine.high %v979, %v979
        %v982 = vunpack.c.l.s4 1966171168
        %v983 = vunpack.c.0.s8 %v982
        %v984 = vlaneseq
        %v985 = vshrl.u32 %v984, 7
        %v986 = vsub.s32 %v983, %v985
        %v987 = vrot.slane %v979, %v986
        %v989 = vunpack.c.l.s4 1966171168
        %v990 = vunpack.c.0.s8 %v989
        %v991 = vlaneseq
        %v992 = vshrl.u32 %v991, 7
        %v993 = vsub.s32 %v990, %v992
        %v994 = vrot.slane %v980, %v993
        %v995 = vlaneseq
        %v996 = vshrl.u32 %v995, 7
        %v997 = vsub.s32 0, %v996
        %v998 = vrot.slane %v987, %v997
        %v999 = vlaneseq
        %v1000 = vshrl.u32 %v999, 7
        %v1001 = vsub.s32 0, %v1000
        %v1002 = vrot.slane %v994, %v1001
        %v1005 = vmul.f32 %v795, %v998
        %v1006 = vmul.f32 %v970, %v1002
        %v1007 = vsel %vm636, %v1005, 0.0
        %1008 = vadd.xlane.f32.xlu0 %v1007
        %v1009 = vpop.xlane.xlu0 %1008
        %v1010 = vsel %vm636, %v1006, 0.0
        %1011 = vadd.xlane.f32.xlu0 %v1010
        %v1012 = vpop.xlane.xlu0 %1011
        %v1013 = vld [vmem:[%s539] sm:$0x3]
        %1015 = vset.pattern.permute.xlu0 0
        %1016 = vperm.xlu0 %1015, %v1013
        %v1017 = vpop.permute.xlu0 %1016
        %v1018 = vlaneseq
        %v1019 = vshrl.u32 %v1018, 7
        %v1020 = vsub.s32 0, %v1019
        %v1021 = vrot.slane %v1017, %v1020
        %v1022 = vlaneseq
        %v1023 = vshrl.u32 %v1022, 7
        %v1024 = vsub.s32 1, %v1023
        %v1025 = vrot.slane %v1017, %v1024
        %v1028 = vadd.f32 %v1009, %v1021
        %v1029 = vadd.f32 %v1012, %v1025
        %1032 = vset.pattern.permute.xlu0 0
        %1033 = vperm.xlu0 %1032, %v1028
        %v1034 = vpop.permute.xlu0 %1033
        %1035 = vset.pattern.permute.xlu0 0
        %1036 = vperm.xlu0 %1035, %v1029
        %v1037 = vpop.permute.xlu0 %1036
        %v1038 = vlaneseq
        %v1039 = vand.u32 %v1038, 127
        %v1040 = vlaneseq
        %v1041 = vshrl.u32 %v1040, 7
        %v1042 = vsub.s32 %v1039, %v1041
        %v1043 = vrot.slane %v1034, %v1042
        %v1044 = vlaneseq
        %v1045 = vshrl.u32 %v1044, 7
        %v1046 = vsub.s32 %v1039, %v1045
        %v1047 = vrot.slane %v1037, %v1046
        %vm1048 = vcmask 1041409
        %v1049 = vsel %vm1048, %v1047, %v1043
        %vm1051 = vcmask 58368
        %1052 = vst.msk [vmem:[%s523] sm:$0x3] %vm1051, %v1049
        %s1053 = sand.u32 %s267, 1
        %s1054 = scalar_lea.sflag [#allocation4], %s1053
        %s1055 = sand.u32 %s267, 1
        %s1056 = smul.addr %s1055, 2
        %s1057 = scalar_lea.vmem [#allocation11], %s1056
        // Predicated region
        $region77: #{tpu_custom_call.1} parent=55 // pred_check
          %p1058 = pneg %p277
        $region78: #{tpu_custom_call.1} parent=55 // pred_check_branch
          %1060 = sbr.rel (%p1058) target = $region80
        $region79: #{tpu_custom_call.1} parent=55 // pred_region
          %s1062 = ssub.s32 32, 32
          %1063 = vsyncadd %s1054, %s1062
          %s1064 = smul.addr %s30, 32
          %s1065 = scalar_lea.hbm %s9, %s1064
          %s1067 = sshll.u32 %s1057, 4
          %s1068 = int_to_ptr.vmem [resolvable:$true] %s1067
          %1070 = dma.vmem_to_hbm [thread:$0]  %s1068, 32, %s1065, %s1054
        $region80: #{tpu_custom_call.1} parent=55 // pred_fallthru
          _
      $region56: #{tpu_custom_call.1} parent=5 // pred_fallthru
        _
      %p1071 = scmp.le.s32.totalorder 2, %s25
      // Predicated region
      $region81: #{tpu_custom_call.1} parent=5 // pred_check
        %p1072 = pneg %p1071
      $region82: #{tpu_custom_call.1} parent=5 // pred_check_branch
        %1074 = sbr.rel (%p1072) target = $region84
      $region83: #{tpu_custom_call.1} parent=5 // pred_region
        %s1075 = ssub.s32 %s25, 2
        // Predicated region
        $region85: #{tpu_custom_call.1} parent=83 // pred_check
          %p1076 = pneg %p283
        $region86: #{tpu_custom_call.1} parent=83 // pred_check_branch
          %1078 = sbr.rel (%p1076) target = $region88
        $region87: #{tpu_custom_call.1} parent=83 // pred_region
          %s1079 = sand.u32 %s268, 1
          %s1080 = scalar_lea.sflag [#allocation4], %s1079
          %s1081 = sand.u32 %s268, 1
          %s1082 = smul.addr %s1081, 2
          %s1083 = scalar_lea.vmem [#allocation11], %s1082
          %1084 = dma.done %s1080, 32
        $region88: #{tpu_custom_call.1} parent=83 // pred_fallthru
          _
      $region84: #{tpu_custom_call.1} parent=5 // pred_fallthru
        _
    $region6: #{tpu_custom_call.1} parent=1 // loop_footer
      %s29 = sadd.s32 1, %s25
    $region7: #{tpu_custom_call.1} parent=1 // loop_footer_branch
      %24 = sbr.rel target = $region3
    $region8: #{tpu_custom_call.1} parent=1 // loop_exit
      _
    %1085 = vsyncpa [#allocation3], 1
    %s1086 = scalar_lea.sflag [#allocation3], 1
    %1087 = vsyncpa %s1086, 1
    %1088 = vsyncpa [#allocation6], 1
    %s1089 = scalar_lea.sflag [#allocation6], 1
    %1090 = vsyncpa %s1089, 1
    %1091 = vsyncpa [#allocation9], 1
    %s1092 = scalar_lea.sflag [#allocation9], 1
    %1093 = vsyncpa %s1092, 1
    %1094 = vsyncpa [#allocation4], 1
    %s1095 = scalar_lea.sflag [#allocation4], 1
    %1096 = vsyncpa %s1095, 1

</llo_original>
